<compile_context>
chip_gen: v7x
topology: tpu7x:2x2x1
jax: 0.10.0
libtpu: 0.0.40
codegen_flags: <defaults>
</compile_context>

<pallas_src>
import functools
import math

import jax
import jax.numpy as jnp
from jax.experimental import pallas as pl
from jax.experimental.pallas import tpu as pltpu

GN_EPS = 1e-5
BN_EPS = 1e-5


def _gelu_exact(x):
    # PyTorch nn.GELU default = exact (erf) GELU (kept for bit-parity).
    return 0.5 * x * (1.0 + jax.lax.erf(x * (1.0 / math.sqrt(2.0))))


# --------------------------------------------------------------------------- #
# Kernel
# --------------------------------------------------------------------------- #
def light_mlp_block_kernel(x_ref, p_ref, out_ref, *, bb, C, Ch):
    """One grid step processes a block of `bb` samples as a (bb*C, S) slab.

    p_ref is ONE packed parameter slab (single DMA), R = bb*C, RH = bb*Ch:
      rows [0, RH)        cols [0, R)       block-diag fc1 weight (gn2 folded)
      rows [0, RH)        col   R           fc1 bias              (gn2 folded)
      rows [RH, RH+R)     cols [0, RH)      block-diag fc2 weight (ls2 folded)
      rows [RH, RH+R)     cols [RH, RH+4)   per-channel [scale1 | bias1 | ls1 | ls2*b2]
      rows [RH+R, RH+3R)  cols [0, 2R)      per-sample GroupNorm averaging matrix
    """
    R = bb * C
    RH = bb * Ch
    r1 = RH + R

    x = x_ref[...].astype(jnp.float32)            # cast in VMEM (free VPU work)

    W1 = p_ref[0:RH, 0:R]                         # (RH, R)
    b1 = p_ref[0:RH, R:R + 1]                     # (RH, 1)
    W2 = p_ref[RH:r1, 0:RH]                       # (R, RH)
    pc = p_ref[RH:r1, RH:RH + 4]                  # (R, 4)
    Mb = p_ref[r1:r1 + 2 * R, 0:2 * R]            # (2R, 2R)

    scale1 = pc[:, 0:1]
    bias1 = pc[:, 1:2]
    ls1 = pc[:, 2:3]
    b2 = pc[:, 3:4]

    def group_norm(t):
        # Fused sum / sum-of-squares: one stacked block, one small MXU dot that
        # both averages within each sample and broadcasts back to every row,
        # then a single lane reduction.  Results stay as (R, 1) keepdims values.
        stacked = jnp.concatenate([t, t * t], axis=0)                       # (2R, S)
        stats = jnp.sum(
            jnp.dot(Mb, stacked, preferred_element_type=jnp.float32),
            axis=1, keepdims=True)                                          # (2R, 1)
        mean = stats[0:R, :]
        var = jnp.maximum(stats[R:2 * R, :] - mean * mean, 0.0)             # clamp >= 0
        return (t - mean) * jax.lax.rsqrt(var + GN_EPS)

    # branch 1: GN1 -> folded (DWConv1x1 + eval-BN) affine -> SiLU -> ls1 residual
    z = group_norm(x) * scale1 + bias1
    z = z * jax.nn.sigmoid(z)                     # SiLU
    x1 = x + ls1 * z

    # branch 2: GN2 -> fc1 -> GELU -> fc2 (gn2 / layer_scale_2 folded) -> residual
    h = jnp.dot(W1, group_norm(x1), preferred_element_type=jnp.float32) + b1   # (RH, S)
    o = jnp.dot(W2, _gelu_exact(h), preferred_element_type=jnp.float32) + b2   # (R, S)
    out_ref[...] = (x1 + o).astype(out_ref.dtype)


# --------------------------------------------------------------------------- #
# One-time parameter folding / packing (hoisted out of the per-call path)
# --------------------------------------------------------------------------- #
def _fold_params(params, *, C, Ch, S, bb):
    f32 = lambda v: jnp.asarray(v, jnp.float32)

    # branch 1: GN1 affine -> depthwise 1x1 conv -> eval BatchNorm  ==> scale1, bias1
    inv_std = jax.lax.rsqrt(f32(params["bn_v"]) + BN_EPS)
    scale1 = f32(params["gn1_w"]) * f32(params["dw_w"]) * f32(params["bn_w"]) * inv_std
    bias1 = (f32(params["gn1_b"]) * f32(params["dw_w"]) - f32(params["bn_m"])) \
        * f32(params["bn_w"]) * inv_std + f32(params["bn_b"])
    ls1 = f32(params["ls1"])
    ls2 = f32(params["ls2"])

    # branch 2: fold GN2 affine into fc1, layer_scale_2 into fc2 ((C, S) layout).
    w1_f = f32(params["w1"]).T * f32(params["gn2_w"])[None, :]                 # (Ch, C)
    b1_f = f32(params["w1"]).T @ f32(params["gn2_b"]) + f32(params["b1"])      # (Ch,)
    w2_f = ls2[:, None] * f32(params["w2"]).T                                  # (C, Ch)
    b2_f = ls2 * f32(params["b2"])                                             # (C,)

    R, RH = bb * C, bb * Ch
    eye = jnp.eye(bb, dtype=jnp.float32)
    W1_bd = jnp.kron(eye, w1_f)                                                # (RH, R)
    W2_bd = jnp.kron(eye, w2_f)                                                # (R, RH)
    b1_t = jnp.tile(b1_f, bb)[:, None]                                         # (RH, 1)
    pc_t = jnp.tile(jnp.stack([scale1, bias1, ls1, b2_f], axis=1), (bb, 1))    # (R, 4)
    inv_n = 1.0 / float(C * S)
    M = jnp.kron(eye, jnp.full((C, C), inv_n, jnp.float32))                    # (R, R)
    Mb = jnp.kron(jnp.eye(2, dtype=jnp.float32), M)                            # (2R, 2R)

    lanes = -(-max(R + 1, RH + 4, 2 * R, 128) // 128) * 128
    rows = -(-(RH + 3 * R) // 8) * 8
    P = jnp.zeros((rows, lanes), jnp.float32)
    P = P.at[0:RH, 0:R].set(W1_bd)
    P = P.at[0:RH, R:R + 1].set(b1_t)
    P = P.at[RH:RH + R, 0:RH].set(W2_bd)
    P = P.at[RH:RH + R, RH:RH + 4].set(pc_t)
    P = P.at[RH + R:RH + 3 * R, 0:2 * R].set(Mb)
    return P


def _num_tensorcores():
    # v7x packs 2 TensorCores per chip; v5e / v6e have 1.
    try:
        kind = jax.devices()[0].device_kind.lower()
    except Exception:
        return 1
    return 2 if "v7" in kind else 1


def _pick_batch_block(B, C):
    # Single grid step on single-TC chips (per-step grid overhead is pure loss);
    # on multi-TC chips split the batch across cores, but only when the per-step
    # (bb*C, S) slab still fills whole 8-sublane tiles.
    n_tc = _num_tensorcores()
    if n_tc > 1 and B % n_tc == 0 and ((B // n_tc) * C) % 8 == 0:
        return B // n_tc
    return B


def build_light_mlp_block(params, in_shape, mlp_ratio=4.0, out_dtype=jnp.float32):
    B, C, H, W = in_shape
    S = H * W
    Ch = int(C * mlp_ratio)
    assert params["w1"].shape == (C, Ch) and params["w2"].shape == (Ch, C), \
        "LightMLPBlock residuals require c1 == c2"
    # TODO(synk): drop / drop_path are assumed 0 (module defaults); BatchNorm is
    # eval-mode; the module's unused `self.linear` is intentionally omitted.

    bb = _pick_batch_block(B, C)
    R = bb * C
    packed = _fold_params(params, C=C, Ch=Ch, S=S, bb=bb)   # folded ONCE

    call = pl.pallas_call(
        functools.partial(light_mlp_block_kernel, bb=bb, C=C, Ch=Ch),
        out_shape=jax.ShapeDtypeStruct((B * C, S), out_dtype),
        grid=(B // bb,),
        in_specs=[
            pl.BlockSpec((R, S), lambda i: (i, 0)),
            pl.BlockSpec(packed.shape, lambda i: (0, 0)),
        ],
        out_specs=pl.BlockSpec((R, S), lambda i: (i, 0)),
        # Note: at large H*W, re-derive the (R, S) block against the per-chip VMEM
        # budget (64 MiB on v7x vs 128 MiB on v5e/v6e) and set vmem_limit_bytes.
        compiler_params=pltpu.CompilerParams(dimension_semantics=("parallel",)),
    )

    @jax.jit
    def run(x_nchw, packed_):
        # (B, C, H, W) -> (B*C, S): pure reshape of contiguous NCHW (no transpose,
        # no host-side dtype cast; the kernel casts in VMEM).
        out = call(x_nchw.reshape(B * C, S), packed_)
        return out.reshape(B, C, H, W)

    return lambda x_nchw: run(x_nchw, packed)


# --------------------------------------------------------------------------- #
# Pure-JAX reference of LightMLPBlock.forward (NCHW, unfolded params)
# --------------------------------------------------------------------------- #
def reference(x, p):
    x = x.astype(jnp.float32)

    def gn(t, w, b):
        m = jnp.mean(t, axis=(1, 2, 3), keepdims=True)
        v = jnp.mean((t - m) ** 2, axis=(1, 2, 3), keepdims=True)
        tn = (t - m) * jax.lax.rsqrt(v + GN_EPS)
        return tn * w[None, :, None, None] + b[None, :, None, None]

    def bc(v):
        return v[None, :, None, None]

    y = gn(x, p["gn1_w"], p["gn1_b"])
    z = y * bc(p["dw_w"])
    z = (z - bc(p["bn_m"])) * bc(jax.lax.rsqrt(p["bn_v"] + BN_EPS)) * bc(p["bn_w"]) + bc(p["bn_b"])
    z = z * jax.nn.sigmoid(z)
    x = x + bc(p["ls1"]) * z

    y2 = gn(x, p["gn2_w"], p["gn2_b"])
    y2f = jnp.transpose(y2, (0, 2, 3, 1))                      # B,H,W,C
    h = _gelu_exact(jnp.einsum("bhwc,cd->bhwd", y2f, p["w1"]) + p["b1"])
    o = jnp.einsum("bhwd,dc->bhwc", h, p["w2"]) + p["b2"]
    o = jnp.transpose(o, (0, 3, 1, 2))
    x = x + bc(p["ls2"]) * o
    return x


if __name__ == "__main__":
    B, C, H, W = 2, 4, 16, 16          # c1 == c2 == 4
    mlp_ratio = 4.0
    Ch = int(C * mlp_ratio)            # mlp hidden dim = 16

    key = jax.random.PRNGKey(0)
    keys = jax.random.split(key, 12)

    def rnd(k, shape, scale=0.1):
        return scale * jax.random.normal(k, shape, dtype=jnp.float32)

    params = {
        "gn1_w": 1.0 + rnd(keys[0], (C,)),
        "gn1_b": rnd(keys[1], (C,)),
        "dw_w":  rnd(keys[2], (C,), 0.5),          # Conv2d(C, C, 1, groups=C), weight (C,1,1,1)
        "bn_w":  1.0 + rnd(keys[3], (C,)),
        "bn_b":  rnd(keys[4], (C,)),
        "bn_m":  rnd(keys[5], (C,)),
        "bn_v":  1.0 + 0.1 * jnp.abs(jax.random.normal(keys[6], (C,), dtype=jnp.float32)),
        "ls1":   1e-5 * jnp.ones((C,), jnp.float32),
        "gn2_w": 1.0 + rnd(keys[7], (C,)),
        "gn2_b": rnd(keys[8], (C,)),
        "w1":    rnd(keys[9], (C, Ch), 0.02),      # fc1: Conv2d(C, Ch, 1) as matmul
        "b1":    jnp.zeros((Ch,), jnp.float32),
        "w2":    rnd(keys[10], (Ch, C), 0.02),     # fc2: Conv2d(Ch, C, 1) as matmul
        "b2":    jnp.zeros((C,), jnp.float32),
        "ls2":   1e-5 * jnp.ones((C,), jnp.float32),
    }

    x = jax.random.normal(keys[11], (B, C, H, W), dtype=jnp.float32)

    fwd = build_light_mlp_block(params, (B, C, H, W), mlp_ratio=mlp_ratio)
    out = fwd(x)
    jax.block_until_ready(out)

    ref = reference(x, params)
    assert out.shape == x.shape
    assert jnp.allclose(out, ref, atol=1e-5, rtol=1e-5), float(jnp.max(jnp.abs(out - ref)))
    print("KERNEL_OK")
</pallas_src>

<mosaic_0001>
module attributes {stable_mosaic.version = 11 : i64} {
  func.func @light_mlp_block_kernel(%arg0: i32, %arg1: memref<8x256xf32, #tpu.memory_space<vmem>>, %arg2: memref<56x128xf32, #tpu.memory_space<vmem>>, %arg3: memref<8x256xf32, #tpu.memory_space<vmem>>) attributes {dimension_semantics = [#tpu.dimension_semantics<parallel>], iteration_bounds = array<i64: 1>, scalar_prefetch = 0 : i64, scratch_operands = 0 : i64, tpu.core_type = #tpu.core_type<tc>, window_params = [{transform_indices = @transform_0, window_bounds = array<i64: 8, 256>}, {pipeline_mode = #tpu.pipeline_mode<synchronous>, transform_indices = @transform_1, window_bounds = array<i64: 56, 128>}, {transform_indices = @transform_2, window_bounds = array<i64: 8, 256>}]} {
    %c0 = arith.constant 0 : index
    %c0_0 = arith.constant 0 : index
    %0 = vector.load %arg1[%c0, %c0_0] : memref<8x256xf32, #tpu.memory_space<vmem>>, vector<8x256xf32>
    %c0_1 = arith.constant 0 : index
    %c0_2 = arith.constant 0 : index
    %1 = vector.load %arg2[%c0_1, %c0_2] : memref<56x128xf32, #tpu.memory_space<vmem>>, vector<32x8xf32>
    %c0_3 = arith.constant 0 : index
    %c8 = arith.constant 8 : index
    %2 = vector.load %arg2[%c0_3, %c8] : memref<56x128xf32, #tpu.memory_space<vmem>>, vector<32x1xf32>
    %c32 = arith.constant 32 : index
    %c0_4 = arith.constant 0 : index
    %3 = vector.load %arg2[%c32, %c0_4] : memref<56x128xf32, #tpu.memory_space<vmem>>, vector<8x32xf32>
    %c32_5 = arith.constant 32 : index
    %c32_6 = arith.constant 32 : index
    %4 = vector.load %arg2[%c32_5, %c32_6] : memref<56x128xf32, #tpu.memory_space<vmem>>, vector<8x4xf32>
    %c40 = arith.constant 40 : index
    %c0_7 = arith.constant 0 : index
    %5 = vector.load %arg2[%c40, %c0_7] : memref<56x128xf32, #tpu.memory_space<vmem>>, vector<16x16xf32>
    %6 = vector.extract_strided_slice %4 {offsets = [0, 0], sizes = [8, 1], strides = [1, 1]} : vector<8x4xf32> to vector<8x1xf32>
    %7 = vector.extract_strided_slice %4 {offsets = [0, 1], sizes = [8, 1], strides = [1, 1]} : vector<8x4xf32> to vector<8x1xf32>
    %8 = vector.extract_strided_slice %4 {offsets = [0, 2], sizes = [8, 1], strides = [1, 1]} : vector<8x4xf32> to vector<8x1xf32>
    %9 = vector.extract_strided_slice %4 {offsets = [0, 3], sizes = [8, 1], strides = [1, 1]} : vector<8x4xf32> to vector<8x1xf32>
    %10 = arith.mulf %0, %0 : vector<8x256xf32>
    %11 = tpu.concatenate %0, %10 in 0 : vector<8x256xf32>, vector<8x256xf32> -> vector<16x256xf32>
    %cst = arith.constant dense<0.000000e+00> : vector<16x256xf32>
    %12 = tpu.matmul %5, %11, %cst {dimension_numbers = #tpu.dot_dimension_numbers<[1], [0], [0], [1], [0, 0, 1, 1], [], []>} : vector<16x16xf32>, vector<16x256xf32>, vector<16x256xf32> -> vector<16x256xf32>
    %cst_8 = arith.constant dense<0.000000e+00> : vector<16xf32>
    %13 = vector.multi_reduction <add>, %12, %cst_8 [1] : vector<16x256xf32> to vector<16xf32>
    %14 = vector.shape_cast %13 : vector<16xf32> to vector<16x1xf32>
    %15 = vector.extract_strided_slice %14 {offsets = [0, 0], sizes = [8, 1], strides = [1, 1]} : vector<16x1xf32> to vector<8x1xf32>
    %16 = vector.extract_strided_slice %14 {offsets = [8, 0], sizes = [8, 1], strides = [1, 1]} : vector<16x1xf32> to vector<8x1xf32>
    %17 = arith.mulf %15, %15 : vector<8x1xf32>
    %18 = arith.subf %16, %17 : vector<8x1xf32>
    %cst_9 = arith.constant 0.000000e+00 : f32
    %19 = vector.broadcast %cst_9 : f32 to vector<8x1xf32>
    %20 = arith.maximumf %18, %19 : vector<8x1xf32>
    %21 = vector.broadcast %15 : vector<8x1xf32> to vector<8x256xf32>
    %22 = arith.subf %0, %21 : vector<8x256xf32>
    %cst_10 = arith.constant 9.99999974E-6 : f32
    %23 = vector.broadcast %cst_10 : f32 to vector<8x1xf32>
    %24 = arith.addf %20, %23 : vector<8x1xf32>
    %25 = math.rsqrt %24 : vector<8x1xf32>
    %26 = vector.broadcast %25 : vector<8x1xf32> to vector<8x256xf32>
    %27 = arith.mulf %22, %26 : vector<8x256xf32>
    %28 = vector.broadcast %6 : vector<8x1xf32> to vector<8x256xf32>
    %29 = arith.mulf %27, %28 : vector<8x256xf32>
    %30 = vector.broadcast %7 : vector<8x1xf32> to vector<8x256xf32>
    %31 = arith.addf %29, %30 : vector<8x256xf32>
    %32 = arith.negf %31 : vector<8x256xf32>
    %33 = math.exp %32 : vector<8x256xf32>
    %cst_11 = arith.constant 1.000000e+00 : f32
    %34 = vector.broadcast %cst_11 : f32 to vector<8x256xf32>
    %35 = arith.addf %34, %33 : vector<8x256xf32>
    %36 = arith.divf %34, %35 : vector<8x256xf32>
    %37 = arith.mulf %31, %36 : vector<8x256xf32>
    %38 = vector.broadcast %8 : vector<8x1xf32> to vector<8x256xf32>
    %39 = arith.mulf %38, %37 : vector<8x256xf32>
    %40 = arith.addf %0, %39 : vector<8x256xf32>
    %41 = arith.mulf %40, %40 : vector<8x256xf32>
    %42 = tpu.concatenate %40, %41 in 0 : vector<8x256xf32>, vector<8x256xf32> -> vector<16x256xf32>
    %cst_12 = arith.constant dense<0.000000e+00> : vector<16x256xf32>
    %43 = tpu.matmul %5, %42, %cst_12 {dimension_numbers = #tpu.dot_dimension_numbers<[1], [0], [0], [1], [0, 0, 1, 1], [], []>} : vector<16x16xf32>, vector<16x256xf32>, vector<16x256xf32> -> vector<16x256xf32>
    %cst_13 = arith.constant dense<0.000000e+00> : vector<16xf32>
    %44 = vector.multi_reduction <add>, %43, %cst_13 [1] : vector<16x256xf32> to vector<16xf32>
    %45 = vector.shape_cast %44 : vector<16xf32> to vector<16x1xf32>
    %46 = vector.extract_strided_slice %45 {offsets = [0, 0], sizes = [8, 1], strides = [1, 1]} : vector<16x1xf32> to vector<8x1xf32>
    %47 = vector.extract_strided_slice %45 {offsets = [8, 0], sizes = [8, 1], strides = [1, 1]} : vector<16x1xf32> to vector<8x1xf32>
    %48 = arith.mulf %46, %46 : vector<8x1xf32>
    %49 = arith.subf %47, %48 : vector<8x1xf32>
    %cst_14 = arith.constant 0.000000e+00 : f32
    %50 = vector.broadcast %cst_14 : f32 to vector<8x1xf32>
    %51 = arith.maximumf %49, %50 : vector<8x1xf32>
    %52 = vector.broadcast %46 : vector<8x1xf32> to vector<8x256xf32>
    %53 = arith.subf %40, %52 : vector<8x256xf32>
    %cst_15 = arith.constant 9.99999974E-6 : f32
    %54 = vector.broadcast %cst_15 : f32 to vector<8x1xf32>
    %55 = arith.addf %51, %54 : vector<8x1xf32>
    %56 = math.rsqrt %55 : vector<8x1xf32>
    %57 = vector.broadcast %56 : vector<8x1xf32> to vector<8x256xf32>
    %58 = arith.mulf %53, %57 : vector<8x256xf32>
    %cst_16 = arith.constant dense<0.000000e+00> : vector<32x256xf32>
    %59 = tpu.matmul %1, %58, %cst_16 {dimension_numbers = #tpu.dot_dimension_numbers<[1], [0], [0], [1], [0, 0, 1, 1], [], []>} : vector<32x8xf32>, vector<8x256xf32>, vector<32x256xf32> -> vector<32x256xf32>
    %60 = vector.broadcast %2 : vector<32x1xf32> to vector<32x256xf32>
    %61 = arith.addf %59, %60 : vector<32x256xf32>
    %cst_17 = arith.constant 5.000000e-01 : f32
    %62 = vector.broadcast %cst_17 : f32 to vector<32x256xf32>
    %63 = arith.mulf %62, %61 : vector<32x256xf32>
    %cst_18 = arith.constant 0.707106769 : f32
    %64 = vector.broadcast %cst_18 : f32 to vector<32x256xf32>
    %65 = arith.mulf %61, %64 : vector<32x256xf32>
    %66 = math.erf %65 : vector<32x256xf32>
    %cst_19 = arith.constant 1.000000e+00 : f32
    %67 = vector.broadcast %cst_19 : f32 to vector<32x256xf32>
    %68 = arith.addf %67, %66 : vector<32x256xf32>
    %69 = arith.mulf %63, %68 : vector<32x256xf32>
    %cst_20 = arith.constant dense<0.000000e+00> : vector<8x256xf32>
    %70 = tpu.matmul %3, %69, %cst_20 {dimension_numbers = #tpu.dot_dimension_numbers<[1], [0], [0], [1], [0, 0, 1, 1], [], []>} : vector<8x32xf32>, vector<32x256xf32>, vector<8x256xf32> -> vector<8x256xf32>
    %71 = vector.broadcast %9 : vector<8x1xf32> to vector<8x256xf32>
    %72 = arith.addf %70, %71 : vector<8x256xf32>
    %73 = arith.addf %40, %72 : vector<8x256xf32>
    %c0_21 = arith.constant 0 : index
    %c0_22 = arith.constant 0 : index
    %74 = vector.load %arg3[%c0_21, %c0_22] : memref<8x256xf32, #tpu.memory_space<vmem>>, vector<8x256xf32>
    tpu.vector_store %arg3[%c0_21, %c0_22], %73 {strides = array<i32>} : memref<8x256xf32, #tpu.memory_space<vmem>>, vector<8x256xf32>,
    return
  }
  func.func @transform_0(%arg0: i32) -> (i32, i32) {
    %c0_i32 = arith.constant 0 : i32
    %c0_i32_0 = arith.constant 0 : i32
    return %arg0, %c0_i32 : i32, i32
  }
  func.func @transform_1(%arg0: i32) -> (i32, i32) {
    %c0_i32 = arith.constant 0 : i32
    %c0_i32_0 = arith.constant 0 : i32
    %c0_i32_1 = arith.constant 0 : i32
    return %c0_i32, %c0_i32_0 : i32, i32
  }
  func.func @transform_2(%arg0: i32) -> (i32, i32) {
    %c0_i32 = arith.constant 0 : i32
    %c0_i32_0 = arith.constant 0 : i32
    return %arg0, %c0_i32 : i32, i32
  }
}

</mosaic_0001>

<llo_original>
// kernel: run.1
$region0: #{run.1}
  #allocation0 [shape = 'u32[]', space=smem, size = 0x4, offset = 0x4, fixed_abs, tag = 'smem constant byte address 0x4 - core index']
  #allocation1 [shape = 'u32[144,128]{1,0:T(1,128)}', space=vmem, size = 0x12000, scoped, tag = 'internal scratch']
  %s0 = inlined_call_operand.vmem [shape: f32[8,256], index: 0, kind: input, shape index: {}]
  %s1 = inlined_call_operand.vmem [shape: f32[56,128], index: 1, kind: input, shape index: {}]
  %s2 = inlined_call_operand.vmem [shape: f32[8,256], index: 2, kind: output, shape index: {}]
  %s3 = sld [smem:[#allocation0]]
  $region18: #{run.1} parent=0
    _
  %s5 = ssub.s32 1, %s3
  %s6 = scalar_select 0, %s5, %s3
  // Predicated region
  $region2: #{run.1} parent=0 // pred_check
    _
  $region3: #{run.1} parent=0 // pred_check_branch
    %8 = sbr.rel (0) target = $region5
  $region4: #{run.1} parent=0 // pred_region
    _
  $region5: #{run.1} parent=0 // pred_fallthru
    _
  // Predicated region
  $region6: #{run.1} parent=0 // pred_check
    _
  $region7: #{run.1} parent=0 // pred_check_branch
    %10 = sbr.rel (0) target = $region9
  $region8: #{run.1} parent=0 // pred_region
    _
  $region9: #{run.1} parent=0 // pred_fallthru
    _
  %v11 = vld [vmem:[%s0] sm:$0xff]
  %v12 = vld [vmem:[%s0 + $0x8] sm:$0xff]
  %v13 = vld [vmem:[%s1] sm:$0xff]
  %v14 = vld [vmem:[%s1 + $0x8] sm:$0xff]
  %v15 = vld [vmem:[%s1 + $0x10] sm:$0xff]
  %v16 = vld [vmem:[%s1 + $0x18] sm:$0xff]
  %v17 = vld [vmem:[%s1 + $0x20] sm:$0xff]
  %v18 = vld [vmem:[%s1 + $0x28] sm:$0xff]
  %v19 = vld [vmem:[%s1 + $0x30] sm:$0xff]
  %v20 = vmul.f32 %v11, %v11
  %v21 = vmul.f32 %v12, %v12
  %vm22 = vcmask 130048
  %v24 = vsel %vm22, %v18, 0
  %v27 = vsel %vm22, %v19, 0
  %29 = vmatprep.subr.mxu0 %v12
  %30 = vmatpush1.msra.mxu0 %v11
  %31 = vmatprep.subr.mxu0 %v21
  %32 = vmatpush1.msra.mxu0 %v20
  %33 = vmatprep.subr.mxu0 0.0
  %34 = vmatpush1.msra.mxu0 0.0
  %35 = vmatprep.subr.mxu0 0.0
  %36 = vmatpush1.msra.mxu0 0.0
  %37 = vmatprep.subr.mxu0 0.0
  %38 = vmatpush1.msra.mxu0 0.0
  %39 = vmatprep.subr.mxu0 0.0
  %40 = vmatpush1.msra.mxu0 0.0
  %41 = vmatprep.subr.mxu0 0.0
  %42 = vmatpush1.msra.mxu0 0.0
  %43 = vmatprep.subr.mxu0 0.0
  %44 = vmatpush1.msra.mxu0 0.0
  %45 = vmatprep.subr.mxu0 0.0
  %46 = vmatpush1.msra.mxu0 0.0
  %47 = vmatprep.subr.mxu0 0.0
  %48 = vmatpush1.msra.mxu0 0.0
  %49 = vmatprep.subr.mxu0 0.0
  %50 = vmatpush1.msra.mxu0 0.0
  %51 = vmatprep.subr.mxu0 0.0
  %52 = vmatpush1.msra.mxu0 0.0
  %53 = vmatprep.subr.mxu0 0.0
  %54 = vmatpush1.msra.mxu0 0.0
  %55 = vmatprep.subr.mxu0 0.0
  %56 = vmatpush1.msra.mxu0 0.0
  %57 = vmatprep.subr.mxu0 0.0
  %58 = vmatpush1.msra.mxu0 0.0
  %59 = vmatprep.subr.mxu0 0.0
  %60 = vmatpush1.msra.mxu0 0.0
  %61 = vmatprep.subr.mxu0 0.0
  %62 = vmatpush1.msra.mxu0 0.0
  %63 = vmatprep.subr.mxu0 0.0
  %64 = vmatpush1.msra.mxu0 0.0
  %65 = vmatprep.subr.mxu0 0.0
  %66 = vmatpush1.msra.mxu0 0.0
  %67 = vmatprep.subr.mxu0 0.0
  %68 = vmatpush1.msra.mxu0 0.0
  %69 = vmatprep.subr.mxu0 0.0
  %70 = vmatpush1.msra.mxu0 0.0
  %71 = vmatprep.subr.mxu0 0.0
  %72 = vmatpush1.msra.mxu0 0.0
  %73 = vmatprep.subr.mxu0 0.0
  %74 = vmatpush1.msra.mxu0 0.0
  %75 = vmatprep.subr.mxu0 0.0
  %76 = vmatpush1.msra.mxu0 0.0
  %77 = vmatprep.subr.mxu0 0.0
  %78 = vmatpush1.msra.mxu0 0.0
  %79 = vmatprep.subr.mxu0 0.0
  %80 = vmatpush1.msra.mxu0 0.0
  %81 = vmatprep.subr.mxu0 0.0
  %82 = vmatpush1.msra.mxu0 0.0
  %83 = vmatprep.subr.mxu0 0.0
  %84 = vmatpush1.msra.mxu0 0.0
  %85 = vmatprep.subr.mxu0 0.0
  %86 = vmatpush1.msra.mxu0 0.0
  %87 = vmatprep.subr.mxu0 0.0
  %88 = vmatpush1.msra.mxu0 0.0
  %89 = vmatprep.subr.mxu0 0.0
  %90 = vmatpush1.msra.mxu0 0.0
  %91 = vmatprep.subr.mxu0 0.0
  %92 = vmatpush1.msra.mxu0 0.0
  %93 = vmatprep.mubr.f32.mxu0 0.0
  %94 = vmatmul.mubr.f32.gmra.mrb[0].mxu0 %v24
  %v95 = vpop.f32.mrb[0].mxu0
  %v96 = vadd.f32 0.0, %v95
  %v97 = vpop.f32.mrb[0].mxu0
  %v98 = vadd.f32 0.0, %v97
  %99 = vmatprep.mubr.f32.mxu0 0.0
  %100 = vmatmul.mubr.f32.gmra.mrb[0].mxu0 %v27
  %v101 = vpop.f32.mrb[0].mxu0
  %v102 = vadd.f32 0.0, %v101
  %v103 = vpop.f32.mrb[0].mxu0
  %v104 = vadd.f32 0.0, %v103
  %105 = vdwg.mxu0
  %v106 = vadd.f32 %v96, %v98
  %107 = vadd.xlane.f32.xlu0 %v106
  %v108 = vpop.xlane.xlu0 %107
  %v109 = vadd.f32 %v102, %v104
  %110 = vadd.xlane.f32.xlu0 %v109
  %v111 = vpop.xlane.xlu0 %110
  %v112 = vmul.f32 %v108, %v108
  %v113 = vsub.f32 %v111, %v112
  %v114 = vmax.f32 %v113, 0.0
  %v115 = vsub.f32 %v11, %v108
  %v116 = vsub.f32 %v12, %v108
  %v117 = vadd.f32 %v114, 1e-05
  %v118 = vrsqrt.pop %v117
  %v119 = vmul.f32 %v115, %v118
  %v120 = vmul.f32 %v116, %v118
  %122 = vset.pattern.permute.xlu0 32
  %123 = vperm.xlu0 %122, %v17
  %v124 = vpop.permute.xlu0 %123
  %v126 = vmul.f32 %v119, %v124
  %v127 = vmul.f32 %v120, %v124
  %128 = vset.pattern.permute.xlu0 33
  %129 = vperm.xlu0 %128, %v17
  %v130 = vpop.permute.xlu0 %129
  %v132 = vadd.f32 %v126, %v130
  %v133 = vadd.f32 %v127, %v130
  %v134 = vxor.u32 %v132, 2147483648
  %v135 = vxor.u32 %v133, 2147483648
  %v136 = vmul.f32 %v134, 1.442695
  %v137 = vpow.pop %v136
  %v138 = vmul.f32 %v135, 1.442695
  %v139 = vpow.pop %v138
  %v140 = vadd.f32 %v137, 1.0
  %v141 = vadd.f32 %v139, 1.0
  %v142 = vrcp.pop %v140
  %v143 = vmul.f32 1.0, %v142
  %v144 = vrcp.pop %v141
  %v145 = vmul.f32 1.0, %v144
  %v146 = vmul.f32 %v132, %v143
  %v147 = vmul.f32 %v133, %v145
  %148 = vset.pattern.permute.xlu0 34
  %149 = vperm.xlu0 %148, %v17
  %v150 = vpop.permute.xlu0 %149
  %v152 = vmul.f32 %v150, %v146
  %v153 = vmul.f32 %v150, %v147
  %v154 = vadd.f32 %v11, %v152
  %v155 = vadd.f32 %v12, %v153
  %v156 = vmul.f32 %v154, %v154
  %v157 = vmul.f32 %v155, %v155
  %158 = vmatprep.subr.mxu0 %v155
  %159 = vmatpush1.msra.mxu0 %v154
  %160 = vmatprep.subr.mxu0 %v157
  %161 = vmatpush1.msra.mxu0 %v156
  %162 = vmatprep.subr.mxu0 0.0
  %163 = vmatpush1.msra.mxu0 0.0
  %164 = vmatprep.subr.mxu0 0.0
  %165 = vmatpush1.msra.mxu0 0.0
  %166 = vmatprep.subr.mxu0 0.0
  %167 = vmatpush1.msra.mxu0 0.0
  %168 = vmatprep.subr.mxu0 0.0
  %169 = vmatpush1.msra.mxu0 0.0
  %170 = vmatprep.subr.mxu0 0.0
  %171 = vmatpush1.msra.mxu0 0.0
  %172 = vmatprep.subr.mxu0 0.0
  %173 = vmatpush1.msra.mxu0 0.0
  %174 = vmatprep.subr.mxu0 0.0
  %175 = vmatpush1.msra.mxu0 0.0
  %176 = vmatprep.subr.mxu0 0.0
  %177 = vmatpush1.msra.mxu0 0.0
  %178 = vmatprep.subr.mxu0 0.0
  %179 = vmatpush1.msra.mxu0 0.0
  %180 = vmatprep.subr.mxu0 0.0
  %181 = vmatpush1.msra.mxu0 0.0
  %182 = vmatprep.subr.mxu0 0.0
  %183 = vmatpush1.msra.mxu0 0.0
  %184 = vmatprep.subr.mxu0 0.0
  %185 = vmatpush1.msra.mxu0 0.0
  %186 = vmatprep.subr.mxu0 0.0
  %187 = vmatpush1.msra.mxu0 0.0
  %188 = vmatprep.subr.mxu0 0.0
  %189 = vmatpush1.msra.mxu0 0.0
  %190 = vmatprep.subr.mxu0 0.0
  %191 = vmatpush1.msra.mxu0 0.0
  %192 = vmatprep.subr.mxu0 0.0
  %193 = vmatpush1.msra.mxu0 0.0
  %194 = vmatprep.subr.mxu0 0.0
  %195 = vmatpush1.msra.mxu0 0.0
  %196 = vmatprep.subr.mxu0 0.0
  %197 = vmatpush1.msra.mxu0 0.0
  %198 = vmatprep.subr.mxu0 0.0
  %199 = vmatpush1.msra.mxu0 0.0
  %200 = vmatprep.subr.mxu0 0.0
  %201 = vmatpush1.msra.mxu0 0.0
  %202 = vmatprep.subr.mxu0 0.0
  %203 = vmatpush1.msra.mxu0 0.0
  %204 = vmatprep.subr.mxu0 0.0
  %205 = vmatpush1.msra.mxu0 0.0
  %206 = vmatprep.subr.mxu0 0.0
  %207 = vmatpush1.msra.mxu0 0.0
  %208 = vmatprep.subr.mxu0 0.0
  %209 = vmatpush1.msra.mxu0 0.0
  %210 = vmatprep.subr.mxu0 0.0
  %211 = vmatpush1.msra.mxu0 0.0
  %212 = vmatprep.subr.mxu0 0.0
  %213 = vmatpush1.msra.mxu0 0.0
  %214 = vmatprep.subr.mxu0 0.0
  %215 = vmatpush1.msra.mxu0 0.0
  %216 = vmatprep.subr.mxu0 0.0
  %217 = vmatpush1.msra.mxu0 0.0
  %218 = vmatprep.subr.mxu0 0.0
  %219 = vmatpush1.msra.mxu0 0.0
  %220 = vmatprep.subr.mxu0 0.0
  %221 = vmatpush1.msra.mxu0 0.0
  %222 = vmatprep.mubr.f32.mxu0 0.0
  %223 = vmatmul.mubr.f32.gmra.mrb[0].mxu0 %v24
  %v224 = vpop.f32.mrb[0].mxu0
  %v225 = vadd.f32 0.0, %v224
  %v226 = vpop.f32.mrb[0].mxu0
  %v227 = vadd.f32 0.0, %v226
  %228 = vmatprep.mubr.f32.mxu0 0.0
  %229 = vmatmul.mubr.f32.gmra.mrb[0].mxu0 %v27
  %v230 = vpop.f32.mrb[0].mxu0
  %v231 = vadd.f32 0.0, %v230
  %v232 = vpop.f32.mrb[0].mxu0
  %v233 = vadd.f32 0.0, %v232
  %234 = vdwg.mxu0
  %v235 = vadd.f32 %v225, %v227
  %236 = vadd.xlane.f32.xlu0 %v235
  %v237 = vpop.xlane.xlu0 %236
  %v238 = vadd.f32 %v231, %v233
  %239 = vadd.xlane.f32.xlu0 %v238
  %v240 = vpop.xlane.xlu0 %239
  %v241 = vmul.f32 %v237, %v237
  %v242 = vsub.f32 %v240, %v241
  %v243 = vmax.f32 %v242, 0.0
  %v244 = vsub.f32 %v154, %v237
  %v245 = vsub.f32 %v155, %v237
  %v246 = vadd.f32 %v243, 1e-05
  %v247 = vrsqrt.pop %v246
  %v248 = vmul.f32 %v244, %v247
  %v249 = vmul.f32 %v245, %v247
  %251 = vset.pattern.permute.xlu0 8
  %252 = vperm.xlu0 %251, %v13
  %v253 = vpop.permute.xlu0 %252
  %256 = vset.pattern.permute.xlu0 8
  %257 = vperm.xlu0 %256, %v14
  %v258 = vpop.permute.xlu0 %257
  %261 = vset.pattern.permute.xlu0 8
  %262 = vperm.xlu0 %261, %v15
  %v263 = vpop.permute.xlu0 %262
  %266 = vset.pattern.permute.xlu0 8
  %267 = vperm.xlu0 %266, %v16
  %v268 = vpop.permute.xlu0 %267
  %vm270 = vcmask 64512
  %v271 = vsel %vm270, %v13, 0
  %v273 = vsel %vm270, %v14, 0
  %v275 = vsel %vm270, %v15, 0
  %v277 = vsel %vm270, %v16, 0
  %279 = vmatprep.subr.mxu0 %v249
  %280 = vmatpush1.msra.mxu0 %v248
  %281 = vmatprep.subr.mxu0 0.0
  %282 = vmatpush1.msra.mxu0 0.0
  %283 = vmatprep.subr.mxu0 0.0
  %284 = vmatpush1.msra.mxu0 0.0
  %285 = vmatprep.subr.mxu0 0.0
  %286 = vmatpush1.msra.mxu0 0.0
  %287 = vmatprep.subr.mxu0 0.0
  %288 = vmatpush1.msra.mxu0 0.0
  %289 = vmatprep.subr.mxu0 0.0
  %290 = vmatpush1.msra.mxu0 0.0
  %291 = vmatprep.subr.mxu0 0.0
  %292 = vmatpush1.msra.mxu0 0.0
  %293 = vmatprep.subr.mxu0 0.0
  %294 = vmatpush1.msra.mxu0 0.0
  %295 = vmatprep.subr.mxu0 0.0
  %296 = vmatpush1.msra.mxu0 0.0
  %297 = vmatprep.subr.mxu0 0.0
  %298 = vmatpush1.msra.mxu0 0.0
  %299 = vmatprep.subr.mxu0 0.0
  %300 = vmatpush1.msra.mxu0 0.0
  %301 = vmatprep.subr.mxu0 0.0
  %302 = vmatpush1.msra.mxu0 0.0
  %303 = vmatprep.subr.mxu0 0.0
  %304 = vmatpush1.msra.mxu0 0.0
  %305 = vmatprep.subr.mxu0 0.0
  %306 = vmatpush1.msra.mxu0 0.0
  %307 = vmatprep.subr.mxu0 0.0
  %308 = vmatpush1.msra.mxu0 0.0
  %309 = vmatprep.subr.mxu0 0.0
  %310 = vmatpush1.msra.mxu0 0.0
  %311 = vmatprep.subr.mxu0 0.0
  %312 = vmatpush1.msra.mxu0 0.0
  %313 = vmatprep.subr.mxu0 0.0
  %314 = vmatpush1.msra.mxu0 0.0
  %315 = vmatprep.subr.mxu0 0.0
  %316 = vmatpush1.msra.mxu0 0.0
  %317 = vmatprep.subr.mxu0 0.0
  %318 = vmatpush1.msra.mxu0 0.0
  %319 = vmatprep.subr.mxu0 0.0
  %320 = vmatpush1.msra.mxu0 0.0
  %321 = vmatprep.subr.mxu0 0.0
  %322 = vmatpush1.msra.mxu0 0.0
  %323 = vmatprep.subr.mxu0 0.0
  %324 = vmatpush1.msra.mxu0 0.0
  %325 = vmatprep.subr.mxu0 0.0
  %326 = vmatpush1.msra.mxu0 0.0
  %327 = vmatprep.subr.mxu0 0.0
  %328 = vmatpush1.msra.mxu0 0.0
  %329 = vmatprep.subr.mxu0 0.0
  %330 = vmatpush1.msra.mxu0 0.0
  %331 = vmatprep.subr.mxu0 0.0
  %332 = vmatpush1.msra.mxu0 0.0
  %333 = vmatprep.subr.mxu0 0.0
  %334 = vmatpush1.msra.mxu0 0.0
  %335 = vmatprep.subr.mxu0 0.0
  %336 = vmatpush1.msra.mxu0 0.0
  %337 = vmatprep.subr.mxu0 0.0
  %338 = vmatpush1.msra.mxu0 0.0
  %339 = vmatprep.subr.mxu0 0.0
  %340 = vmatpush1.msra.mxu0 0.0
  %341 = vmatprep.subr.mxu0 0.0
  %342 = vmatpush1.msra.mxu0 0.0
  %343 = vmatprep.mubr.f32.mxu0 0.0
  %344 = vmatmul.mubr.f32.gmra.mrb[0].mxu0 %v271
  %v345 = vpop.f32.mrb[0].mxu0
  %v346 = vadd.f32 %v253, %v345
  %v347 = vpop.f32.mrb[0].mxu0
  %v348 = vadd.f32 %v253, %v347
  %349 = vmatprep.mubr.f32.mxu0 0.0
  %350 = vmatmul.mubr.f32.gmra.mrb[0].mxu0 %v273
  %v351 = vpop.f32.mrb[0].mxu0
  %v352 = vadd.f32 %v258, %v351
  %v353 = vpop.f32.mrb[0].mxu0
  %v354 = vadd.f32 %v258, %v353
  %355 = vmatprep.mubr.f32.mxu0 0.0
  %356 = vmatmul.mubr.f32.gmra.mrb[0].mxu0 %v275
  %v357 = vpop.f32.mrb[0].mxu0
  %v358 = vadd.f32 %v263, %v357
  %v359 = vpop.f32.mrb[0].mxu0
  %v360 = vadd.f32 %v263, %v359
  %361 = vmatprep.mubr.f32.mxu0 0.0
  %362 = vmatmul.mubr.f32.gmra.mrb[0].mxu0 %v277
  %v363 = vpop.f32.mrb[0].mxu0
  %v364 = vadd.f32 %v268, %v363
  %v365 = vpop.f32.mrb[0].mxu0
  %v366 = vadd.f32 %v268, %v365
  %367 = vdwg.mxu0
  %v368 = vmul.f32 %v346, 0.5
  %v369 = vmul.f32 %v348, 0.5
  %v370 = vmul.f32 %v352, 0.5
  %v371 = vmul.f32 %v354, 0.5
  %v372 = vmul.f32 %v358, 0.5
  %v373 = vmul.f32 %v360, 0.5
  %v374 = vmul.f32 %v364, 0.5
  %v375 = vmul.f32 %v366, 0.5
  %v376 = vmul.f32 %v346, 0.70710677
  %v377 = vmul.f32 %v348, 0.70710677
  %v378 = vmul.f32 %v352, 0.70710677
  %v379 = vmul.f32 %v354, 0.70710677
  %v380 = vmul.f32 %v358, 0.70710677
  %v381 = vmul.f32 %v360, 0.70710677
  %v382 = vmul.f32 %v364, 0.70710677
  %v383 = vmul.f32 %v366, 0.70710677
  %v384 = verf.f32.pop %v376
  %v385 = verf.f32.pop %v377
  %v386 = verf.f32.pop %v378
  %v387 = verf.f32.pop %v379
  %v388 = verf.f32.pop %v380
  %v389 = verf.f32.pop %v381
  %v390 = verf.f32.pop %v382
  %v391 = verf.f32.pop %v383
  %v392 = vadd.f32 %v384, 1.0
  %v393 = vadd.f32 %v385, 1.0
  %v394 = vadd.f32 %v386, 1.0
  %v395 = vadd.f32 %v387, 1.0
  %v396 = vadd.f32 %v388, 1.0
  %v397 = vadd.f32 %v389, 1.0
  %v398 = vadd.f32 %v390, 1.0
  %v399 = vadd.f32 %v391, 1.0
  %v400 = vmul.f32 %v368, %v392
  %v401 = vmul.f32 %v369, %v393
  %v402 = vmul.f32 %v370, %v394
  %v403 = vmul.f32 %v371, %v395
  %v404 = vmul.f32 %v372, %v396
  %v405 = vmul.f32 %v373, %v397
  %v406 = vmul.f32 %v374, %v398
  %v407 = vmul.f32 %v375, %v399
  %408 = vset.pattern.permute.xlu0 35
  %409 = vperm.xlu0 %408, %v17
  %v410 = vpop.permute.xlu0 %409
  %vm412 = vcmask 261120
  %v413 = vsel %vm412, %v17, 0
  %415 = vmatprep.subr.mxu0 %v401
  %416 = vmatpush1.msra.mxu0 %v400
  %417 = vmatprep.subr.mxu0 %v403
  %418 = vmatpush1.msra.mxu0 %v402
  %419 = vmatprep.subr.mxu0 %v405
  %420 = vmatpush1.msra.mxu0 %v404
  %421 = vmatprep.subr.mxu0 %v407
  %422 = vmatpush1.msra.mxu0 %v406
  %423 = vmatprep.subr.mxu0 0.0
  %424 = vmatpush1.msra.mxu0 0.0
  %425 = vmatprep.subr.mxu0 0.0
  %426 = vmatpush1.msra.mxu0 0.0
  %427 = vmatprep.subr.mxu0 0.0
  %428 = vmatpush1.msra.mxu0 0.0
  %429 = vmatprep.subr.mxu0 0.0
  %430 = vmatpush1.msra.mxu0 0.0
  %431 = vmatprep.subr.mxu0 0.0
  %432 = vmatpush1.msra.mxu0 0.0
  %433 = vmatprep.subr.mxu0 0.0
  %434 = vmatpush1.msra.mxu0 0.0
  %435 = vmatprep.subr.mxu0 0.0
  %436 = vmatpush1.msra.mxu0 0.0
  %437 = vmatprep.subr.mxu0 0.0
  %438 = vmatpush1.msra.mxu0 0.0
  %439 = vmatprep.subr.mxu0 0.0
  %440 = vmatpush1.msra.mxu0 0.0
  %441 = vmatprep.subr.mxu0 0.0
  %442 = vmatpush1.msra.mxu0 0.0
  %443 = vmatprep.subr.mxu0 0.0
  %444 = vmatpush1.msra.mxu0 0.0
  %445 = vmatprep.subr.mxu0 0.0
  %446 = vmatpush1.msra.mxu0 0.0
  %447 = vmatprep.subr.mxu0 0.0
  %448 = vmatpush1.msra.mxu0 0.0
  %449 = vmatprep.subr.mxu0 0.0
  %450 = vmatpush1.msra.mxu0 0.0
  %451 = vmatprep.subr.mxu0 0.0
  %452 = vmatpush1.msra.mxu0 0.0
  %453 = vmatprep.subr.mxu0 0.0
  %454 = vmatpush1.msra.mxu0 0.0
  %455 = vmatprep.subr.mxu0 0.0
  %456 = vmatpush1.msra.mxu0 0.0
  %457 = vmatprep.subr.mxu0 0.0
  %458 = vmatpush1.msra.mxu0 0.0
  %459 = vmatprep.subr.mxu0 0.0
  %460 = vmatpush1.msra.mxu0 0.0
  %461 = vmatprep.subr.mxu0 0.0
  %462 = vmatpush1.msra.mxu0 0.0
  %463 = vmatprep.subr.mxu0 0.0
  %464 = vmatpush1.msra.mxu0 0.0
  %465 = vmatprep.subr.mxu0 0.0
  %466 = vmatpush1.msra.mxu0 0.0
  %467 = vmatprep.subr.mxu0 0.0
  %468 = vmatpush1.msra.mxu0 0.0
  %469 = vmatprep.subr.mxu0 0.0
  %470 = vmatpush1.msra.mxu0 0.0
  %471 = vmatprep.subr.mxu0 0.0
  %472 = vmatpush1.msra.mxu0 0.0
  %473 = vmatprep.subr.mxu0 0.0
  %474 = vmatpush1.msra.mxu0 0.0
  %475 = vmatprep.subr.mxu0 0.0
  %476 = vmatpush1.msra.mxu0 0.0
  %477 = vmatprep.subr.mxu0 0.0
  %478 = vmatpush1.msra.mxu0 0.0
  %479 = vmatprep.mubr.f32.mxu0 0.0
  %480 = vmatmul.mubr.f32.gmra.mrb[0].mxu0 %v413
  %v481 = vpop.f32.mrb[0].mxu0
  %v482 = vadd.f32 %v410, %v481
  %v483 = vpop.f32.mrb[0].mxu0
  %v484 = vadd.f32 %v410, %v483
  %485 = vdwg.mxu0
  %v486 = vadd.f32 %v154, %v482
  %v487 = vadd.f32 %v155, %v484
  %488 = vst [vmem:[%s2] sm:$0xff] %v486
  %489 = vst [vmem:[%s2 + $0x8] sm:$0xff] %v487
  // Predicated region
  $region10: #{run.1} parent=0 // pred_check
    _
  $region11: #{run.1} parent=0 // pred_check_branch
    %491 = sbr.rel (0) target = $region13
  $region12: #{run.1} parent=0 // pred_region
    _
  $region13: #{run.1} parent=0 // pred_fallthru
    _
  // Predicated region
  $region14: #{run.1} parent=0 // pred_check
    _
  $region15: #{run.1} parent=0 // pred_check_branch
    %493 = sbr.rel (0) target = $region17
  $region16: #{run.1} parent=0 // pred_region
    _
  $region17: #{run.1} parent=0 // pred_fallthru
    _

</llo_original>
